<compile_context>
chip_gen: v6e
topology: v6e:2x2x1
jax: 0.10.0
libtpu: 0.0.40
codegen_flags: <defaults>
</compile_context>

<pallas_src>
import jax
import jax.numpy as jnp
from jax import lax
from jax.experimental import pallas as pl
from jax.experimental.pallas import tpu as pltpu


# ---------------------------------------------------------------------------
# Kernel: one batch tile of the full MLP hot path (3 MXU dots, lane-dense out).
# ---------------------------------------------------------------------------
def soft_q_kernel(obs_ref, act_ref, w1o_ref, w1a_ref, b1_ref,
                  w2_ref, b2_ref, w3_ref, b3_ref, o_ref):
    obs = obs_ref[...]                       # (TB, obs_dim)  bf16
    act = act_ref[...]                       # (TB, act_dim)  bf16

    # Hoisted single reads of the small resident tensors.
    b1 = b1_ref[...]                         # (1, Hp)  f32
    b2 = b2_ref[...]                         # (1, Hp)  f32
    w3_row = w3_ref[...]                     # (1, Hp)  bf16
    b3 = b3_ref[0, 0]                        # scalar   f32 (SMEM)

    # Layer 1 with the concat fused into the matmul:
    #   [obs, act] @ w1 == obs @ w1[:obs_dim] + act @ w1[obs_dim:]
    h = (jnp.dot(obs, w1o_ref[...], preferred_element_type=jnp.float32)
         + jnp.dot(act, w1a_ref[...], preferred_element_type=jnp.float32)
         + b1)
    h = jnp.maximum(h, 0.0)

    # Layer 2 (bf16 operands, f32 accumulation; bias/ReLU in f32).
    h = jnp.dot(h.astype(jnp.bfloat16), w2_ref[...],
                preferred_element_type=jnp.float32) + b2
    h = jnp.maximum(h, 0.0)

    # Output layer (out_features == 1): contract the hidden dim so the MXU
    # emits a lane-dense (1, TB) row directly -> unmasked stores.
    q = lax.dot_general(
        w3_row, h.astype(jnp.bfloat16),
        dimension_numbers=(((1,), (1,)), ((), ())),
        preferred_element_type=jnp.float32)          # (1, TB)
    o_ref[...] = (q + b3).astype(o_ref.dtype)


# ---------------------------------------------------------------------------
# Host-side parameter handling.
# ---------------------------------------------------------------------------
def init_params(key, in_dim, hidden, out_dim):
    """Deterministic PyTorch-nn.Linear-style uniform(+/- 1/sqrt(fan_in)) init."""
    ks = jax.random.split(key, 6)

    def linear(kw, kb, fan_in, fan_out):
        bound = 1.0 / jnp.sqrt(jnp.float32(fan_in))
        w = jax.random.uniform(kw, (fan_in, fan_out), jnp.float32, -bound, bound)
        b = jax.random.uniform(kb, (1, fan_out), jnp.float32, -bound, bound)
        return w, b

    w1, b1 = linear(ks[0], ks[1], in_dim, hidden)
    w2, b2 = linear(ks[2], ks[3], hidden, hidden)
    w3, b3 = linear(ks[4], ks[5], hidden, out_dim)
    return (w1, b1, w2, b2, w3, b3)


def prepare_params(params, obs_dim, act_dim, lane=128):
    """One-time prep: split w1 for the fused concat, zero-pad the hidden dim up
    to a multiple of 128 lanes (exact: padded units are dead), cast matmul
    weights to bf16 (MXU-native), keep biases in f32."""
    w1, b1, w2, b2, w3, b3 = params
    in_dim, hidden = w1.shape
    out_dim = w3.shape[1]
    assert out_dim == 1, "SoftQNetwork emits a single Q-value per row"
    assert in_dim == obs_dim + act_dim
    hp = ((hidden + lane - 1) // lane) * lane

    w1p = jnp.zeros((in_dim, hp), jnp.float32).at[:, :hidden].set(w1)
    w1_obs = w1p[:obs_dim].astype(jnp.bfloat16)
    w1_act = w1p[obs_dim:].astype(jnp.bfloat16)
    b1p = jnp.zeros((1, hp), jnp.float32).at[:, :hidden].set(b1)
    w2p = jnp.zeros((hp, hp), jnp.float32).at[:hidden, :hidden].set(w2)
    w2p = w2p.astype(jnp.bfloat16)
    b2p = jnp.zeros((1, hp), jnp.float32).at[:, :hidden].set(b2)
    w3_row = jnp.zeros((1, hp), jnp.float32).at[:, :hidden].set(w3[:, 0][None, :])
    w3_row = w3_row.astype(jnp.bfloat16)
    b3p = jnp.reshape(b3, (1, 1)).astype(jnp.float32)
    return (w1_obs, w1_act, b1p, w2p, b2p, w3_row, b3p)


def _round_up(x, m):
    return ((x + m - 1) // m) * m


# ---------------------------------------------------------------------------
# Wrapper: batch tiling + pallas_call.
# ---------------------------------------------------------------------------
def soft_q_forward(obs, actions, prepped, *, tb=4096):
    B, obs_dim = obs.shape
    act_dim = actions.shape[1]
    w1_obs, w1_act, b1, w2, b2, w3_row, b3 = prepped

    # bf16 input stream (halves obs/act HBM bytes; MXU-native operands).
    obs = obs.astype(jnp.bfloat16)
    actions = actions.astype(jnp.bfloat16)

    if B <= 256:
        # Single exact tile (block == full array shape, no (8,128) constraint).
        TB, Bp = B, B
    else:
        # Tiled path: TB a multiple of 128 (lane-dense output blocks), capped
        # at `tb`, and chosen so the grid has >= 2 steps (v7x megacore).
        TB = min(tb, _round_up(pl.cdiv(B, 2), 128))
        Bp = _round_up(B, TB)
        pad = Bp - B
        if pad:
            obs = jnp.pad(obs, ((0, pad), (0, 0)))
            actions = jnp.pad(actions, ((0, pad), (0, 0)))

    grid = (Bp // TB,)

    def batch_tiled(feat):
        return pl.BlockSpec((TB, feat), lambda i: (i, 0))

    def resident(arr):
        # Constant index_map -> same block every step -> stays VMEM-resident.
        return pl.BlockSpec(arr.shape, lambda i: (0, 0))

    out = pl.pallas_call(
        soft_q_kernel,
        out_shape=jax.ShapeDtypeStruct((1, Bp), jnp.float32),
        grid=grid,
        in_specs=[
            batch_tiled(obs_dim),
            batch_tiled(act_dim),
            resident(w1_obs), resident(w1_act), resident(b1),
            resident(w2), resident(b2),
            resident(w3_row),
            pl.BlockSpec(memory_space=pltpu.MemorySpace.SMEM),   # b3 scalar
        ],
        out_specs=pl.BlockSpec((1, TB), lambda i: (0, i)),
        compiler_params=pltpu.CompilerParams(
            dimension_semantics=("parallel",)),
    )(obs, actions, w1_obs, w1_act, b1, w2, b2, w3_row, b3)

    # (1, Bp) lane-dense slab -> (B, 1) column, matching out.view(B, -1).
    return out.reshape(Bp, 1)[:B]


# ---------------------------------------------------------------------------
# Pure-JAX reference (original, unpadded f32 parameters).
# ---------------------------------------------------------------------------
def reference_forward(obs, actions, params):
    w1, b1, w2, b2, w3, b3 = params
    x = jnp.concatenate(
        [obs.astype(jnp.float32), actions.astype(jnp.float32)], axis=1)
    h = jnp.maximum(x @ w1 + b1, 0.0)
    h = jnp.maximum(h @ w2 + b2, 0.0)
    out = h @ w3 + b3
    return out.reshape(out.shape[0], -1)


if __name__ == "__main__":
    # Shapes consistent with the module: config.layer_size=32, n_layers=2, out=1.
    OBS_DIM, ACT_DIM, HIDDEN = 12, 4, 32

    key = jax.random.PRNGKey(0)
    k_obs, k_act, k_params, k_obs2, k_act2 = jax.random.split(key, 5)
    params = init_params(k_params, OBS_DIM + ACT_DIM, HIDDEN, 1)
    prepped = prepare_params(params, OBS_DIM, ACT_DIM)

    # Tolerance is loosened vs. the pure-f32 reference because the MXU operands
    # are bf16 (f32 accumulation keeps the error small but not at 1e-4).
    ATOL = RTOL = 5e-2

    # Small batch: single exact tile.
    B = 8
    obs = jax.random.normal(k_obs, (B, OBS_DIM), jnp.float32)
    actions = jax.random.normal(k_act, (B, ACT_DIM), jnp.float32)
    out = jax.block_until_ready(soft_q_forward(obs, actions, prepped))
    ref = reference_forward(obs, actions, params)
    assert out.shape == (B, 1), out.shape
    assert jnp.allclose(out, ref, atol=ATOL, rtol=RTOL), (out, ref)

    # Larger batch: exercises the tiled, pipelined, padded, lane-dense-output
    # path with a 2-step grid (700 -> two 384-row tiles, padded to 768).
    B2 = 700
    obs2 = jax.random.normal(k_obs2, (B2, OBS_DIM), jnp.float32)
    actions2 = jax.random.normal(k_act2, (B2, ACT_DIM), jnp.float32)
    out2 = jax.block_until_ready(soft_q_forward(obs2, actions2, prepped))
    ref2 = reference_forward(obs2, actions2, params)
    assert out2.shape == (B2, 1), out2.shape
    assert jnp.allclose(out2, ref2, atol=ATOL, rtol=RTOL), (out2, ref2)

    print("KERNEL_OK")
</pallas_src>

<mosaic_0001>
module attributes {stable_mosaic.version = 11 : i64} {
  func.func @soft_q_kernel(%arg0: i32, %arg1: memref<8x12xbf16, #tpu.memory_space<vmem>>, %arg2: memref<8x4xbf16, #tpu.memory_space<vmem>>, %arg3: memref<12x128xbf16, #tpu.memory_space<vmem>>, %arg4: memref<4x128xbf16, #tpu.memory_space<vmem>>, %arg5: memref<1x128xf32, #tpu.memory_space<vmem>>, %arg6: memref<128x128xbf16, #tpu.memory_space<vmem>>, %arg7: memref<1x128xf32, #tpu.memory_space<vmem>>, %arg8: memref<1x128xbf16, #tpu.memory_space<vmem>>, %arg9: memref<1x1xf32, #tpu.memory_space<smem>>, %arg10: memref<1x8xf32, #tpu.memory_space<vmem>>) attributes {dimension_semantics = [#tpu.dimension_semantics<parallel>], iteration_bounds = array<i64: 1>, scalar_prefetch = 0 : i64, scratch_operands = 0 : i64, tpu.core_type = #tpu.core_type<tc>, window_params = [{transform_indices = @transform_0, window_bounds = array<i64: 8, 12>}, {transform_indices = @transform_1, window_bounds = array<i64: 8, 4>}, {pipeline_mode = #tpu.pipeline_mode<synchronous>, transform_indices = @transform_2, window_bounds = array<i64: 12, 128>}, {pipeline_mode = #tpu.pipeline_mode<synchronous>, transform_indices = @transform_3, window_bounds = array<i64: 4, 128>}, {pipeline_mode = #tpu.pipeline_mode<synchronous>, transform_indices = @transform_4, window_bounds = array<i64: 1, 128>}, {pipeline_mode = #tpu.pipeline_mode<synchronous>, transform_indices = @transform_5, window_bounds = array<i64: 128, 128>}, {pipeline_mode = #tpu.pipeline_mode<synchronous>, transform_indices = @transform_6, window_bounds = array<i64: 1, 128>}, {pipeline_mode = #tpu.pipeline_mode<synchronous>, transform_indices = @transform_7, window_bounds = array<i64: 1, 128>}, {transform_indices = @transform_8, window_bounds = array<i64: 1, 1>}, {transform_indices = @transform_9, window_bounds = array<i64: 1, 8>}]} {
    %c0 = arith.constant 0 : index
    %c0_0 = arith.constant 0 : index
    %0 = vector.load %arg1[%c0, %c0_0] : memref<8x12xbf16, #tpu.memory_space<vmem>>, vector<8x12xbf16>
    %c0_1 = arith.constant 0 : index
    %c0_2 = arith.constant 0 : index
    %1 = vector.load %arg2[%c0_1, %c0_2] : memref<8x4xbf16, #tpu.memory_space<vmem>>, vector<8x4xbf16>
    %c0_3 = arith.constant 0 : index
    %c0_4 = arith.constant 0 : index
    %2 = vector.load %arg5[%c0_3, %c0_4] : memref<1x128xf32, #tpu.memory_space<vmem>>, vector<1x128xf32>
    %c0_5 = arith.constant 0 : index
    %c0_6 = arith.constant 0 : index
    %3 = vector.load %arg7[%c0_5, %c0_6] : memref<1x128xf32, #tpu.memory_space<vmem>>, vector<1x128xf32>
    %c0_7 = arith.constant 0 : index
    %c0_8 = arith.constant 0 : index
    %4 = vector.load %arg8[%c0_7, %c0_8] : memref<1x128xbf16, #tpu.memory_space<vmem>>, vector<1x128xbf16>
    %c0_9 = arith.constant 0 : index
    %c0_10 = arith.constant 0 : index
    %5 = memref.load %arg9[%c0_9, %c0_10] : memref<1x1xf32, #tpu.memory_space<smem>>
    %c0_11 = arith.constant 0 : index
    %c0_12 = arith.constant 0 : index
    %6 = vector.load %arg3[%c0_11, %c0_12] : memref<12x128xbf16, #tpu.memory_space<vmem>>, vector<12x128xbf16>
    %cst = arith.constant dense<0.000000e+00> : vector<8x128xf32>
    %7 = tpu.matmul %0, %6, %cst {dimension_numbers = #tpu.dot_dimension_numbers<[1], [0], [0], [1], [0, 0, 1, 1], [], []>} : vector<8x12xbf16>, vector<12x128xbf16>, vector<8x128xf32> -> vector<8x128xf32>
    %c0_13 = arith.constant 0 : index
    %c0_14 = arith.constant 0 : index
    %8 = vector.load %arg4[%c0_13, %c0_14] : memref<4x128xbf16, #tpu.memory_space<vmem>>, vector<4x128xbf16>
    %cst_15 = arith.constant dense<0.000000e+00> : vector<8x128xf32>
    %9 = tpu.matmul %1, %8, %cst_15 {dimension_numbers = #tpu.dot_dimension_numbers<[1], [0], [0], [1], [0, 0, 1, 1], [], []>} : vector<8x4xbf16>, vector<4x128xbf16>, vector<8x128xf32> -> vector<8x128xf32>
    %10 = arith.addf %7, %9 : vector<8x128xf32>
    %11 = vector.broadcast %2 : vector<1x128xf32> to vector<8x128xf32>
    %12 = arith.addf %10, %11 : vector<8x128xf32>
    %cst_16 = arith.constant 0.000000e+00 : f32
    %13 = vector.broadcast %cst_16 : f32 to vector<8x128xf32>
    %14 = arith.maximumf %12, %13 : vector<8x128xf32>
    %15 = arith.truncf %14 : vector<8x128xf32> to vector<8x128xbf16>
    %c0_17 = arith.constant 0 : index
    %c0_18 = arith.constant 0 : index
    %16 = vector.load %arg6[%c0_17, %c0_18] : memref<128x128xbf16, #tpu.memory_space<vmem>>, vector<128x128xbf16>
    %cst_19 = arith.constant dense<0.000000e+00> : vector<8x128xf32>
    %17 = tpu.matmul %15, %16, %cst_19 {dimension_numbers = #tpu.dot_dimension_numbers<[1], [0], [0], [1], [0, 0, 1, 1], [], []>} : vector<8x128xbf16>, vector<128x128xbf16>, vector<8x128xf32> -> vector<8x128xf32>
    %18 = vector.broadcast %3 : vector<1x128xf32> to vector<8x128xf32>
    %19 = arith.addf %17, %18 : vector<8x128xf32>
    %cst_20 = arith.constant 0.000000e+00 : f32
    %20 = vector.broadcast %cst_20 : f32 to vector<8x128xf32>
    %21 = arith.maximumf %19, %20 : vector<8x128xf32>
    %22 = arith.truncf %21 : vector<8x128xf32> to vector<8x128xbf16>
    %cst_21 = arith.constant dense<0.000000e+00> : vector<1x8xf32>
    %23 = tpu.matmul %4, %22, %cst_21 {dimension_numbers = #tpu.dot_dimension_numbers<[1], [1], [0], [0], [0, 0, 1, 0], [], []>} : vector<1x128xbf16>, vector<8x128xbf16>, vector<1x8xf32> -> vector<1x8xf32>
    %24 = vector.broadcast %5 : f32 to vector<1x8xf32>
    %25 = arith.addf %23, %24 : vector<1x8xf32>
    %c0_22 = arith.constant 0 : index
    %c0_23 = arith.constant 0 : index
    %26 = vector.load %arg10[%c0_22, %c0_23] : memref<1x8xf32, #tpu.memory_space<vmem>>, vector<1x8xf32>
    tpu.vector_store %arg10[%c0_22, %c0_23], %25 {strides = array<i32>} : memref<1x8xf32, #tpu.memory_space<vmem>>, vector<1x8xf32>,
    return
  }
  func.func @transform_0(%arg0: i32) -> (i32, i32) {
    %c0_i32 = arith.constant 0 : i32
    %c0_i32_0 = arith.constant 0 : i32
    return %arg0, %c0_i32 : i32, i32
  }
  func.func @transform_1(%arg0: i32) -> (i32, i32) {
    %c0_i32 = arith.constant 0 : i32
    %c0_i32_0 = arith.constant 0 : i32
    return %arg0, %c0_i32 : i32, i32
  }
  func.func @transform_2(%arg0: i32) -> (i32, i32) {
    %c0_i32 = arith.constant 0 : i32
    %c0_i32_0 = arith.constant 0 : i32
    %c0_i32_1 = arith.constant 0 : i32
    return %c0_i32, %c0_i32_0 : i32, i32
  }
  func.func @transform_3(%arg0: i32) -> (i32, i32) {
    %c0_i32 = arith.constant 0 : i32
    %c0_i32_0 = arith.constant 0 : i32
    %c0_i32_1 = arith.constant 0 : i32
    return %c0_i32, %c0_i32_0 : i32, i32
  }
  func.func @transform_4(%arg0: i32) -> (i32, i32) {
    %c0_i32 = arith.constant 0 : i32
    %c0_i32_0 = arith.constant 0 : i32
    %c0_i32_1 = arith.constant 0 : i32
    return %c0_i32, %c0_i32_0 : i32, i32
  }
  func.func @transform_5(%arg0: i32) -> (i32, i32) {
    %c0_i32 = arith.constant 0 : i32
    %c0_i32_0 = arith.constant 0 : i32
    %c0_i32_1 = arith.constant 0 : i32
    return %c0_i32, %c0_i32_0 : i32, i32
  }
  func.func @transform_6(%arg0: i32) -> (i32, i32) {
    %c0_i32 = arith.constant 0 : i32
    %c0_i32_0 = arith.constant 0 : i32
    %c0_i32_1 = arith.constant 0 : i32
    return %c0_i32, %c0_i32_0 : i32, i32
  }
  func.func @transform_7(%arg0: i32) -> (i32, i32) {
    %c0_i32 = arith.constant 0 : i32
    %c0_i32_0 = arith.constant 0 : i32
    %c0_i32_1 = arith.constant 0 : i32
    return %c0_i32, %c0_i32_0 : i32, i32
  }
  func.func @transform_8(%arg0: i32) -> (i32, i32) {
    %c0_i32 = arith.constant 0 : i32
    %c0_i32_0 = arith.constant 0 : i32
    %c0_i32_1 = arith.constant 0 : i32
    return %c0_i32, %c0_i32_0 : i32, i32
  }
  func.func @transform_9(%arg0: i32) -> (i32, i32) {
    %c0_i32 = arith.constant 0 : i32
    %c0_i32_0 = arith.constant 0 : i32
    return %c0_i32, %arg0 : i32, i32
  }
}

</mosaic_0001>

<llo_original>
// kernel: tpu_custom_call.1
$region0: #{tpu_custom_call.1}
  #allocation0 [shape = 'u32[]', space=smem, size = 0x4, offset = 0x4, fixed_abs, tag = 'smem constant byte address 0x4 - core index']
  #allocation1 [shape = 'u32[144,128]{1,0:T(1,128)}', space=vmem, size = 0x12000, scoped, tag = 'internal scratch']
  #allocation2 [shape = 'f32[1,1]{1,0:T(1,128)S(6)}', space=smem, size = 0x200, scoped, tag = 'scoped memory for tpu_custom_call.1']
  %s0 = inlined_call_operand.hbm [shape: bf16[8,12], index: 0, kind: input, shape index: {}]
  %s1 = inlined_call_operand.vmem [shape: bf16[8,4], index: 1, kind: input, shape index: {}]
  %s2 = inlined_call_operand.vmem [shape: bf16[12,128], index: 2, kind: input, shape index: {}]
  %s3 = inlined_call_operand.vmem [shape: bf16[4,128], index: 3, kind: input, shape index: {}]
  %s4 = inlined_call_operand.vmem [shape: f32[1,128], index: 4, kind: input, shape index: {}]
  %s5 = inlined_call_operand.hbm [shape: bf16[128,128], index: 5, kind: input, shape index: {}]
  %s6 = inlined_call_operand.vmem [shape: f32[1,128], index: 6, kind: input, shape index: {}]
  %s7 = inlined_call_operand.vmem [shape: bf16[1,128], index: 7, kind: input, shape index: {}]
  %s8 = inlined_call_operand.<no memory space> [shape: f32[1,1], index: 8, kind: input, shape index: {}]
  %s9 = inlined_call_operand.hbm [shape: f32[1,8], index: 9, kind: output, shape index: {}]
  %s10 = sld [smem:[#allocation0]]
  $region54: #{tpu_custom_call.1} parent=0
    _
  %s12 = ssub.s32 1, %s10
  %s13 = scalar_select 0, %s12, %s10
  %14 = sst [smem:[#allocation2]] %s8
  $region1: #{tpu_custom_call.1} parent=0
    #allocation3 [shape = 'u8[2048]{0}', space=vmem, size = 0x800, scoped, tag = 'input window, operand 0, single buffered']
    #allocation4 [shape = 's32[1]{0}', space=sflag, size = 0x4, scoped, tag = 'scoped memory for tpu_custom_call.1']
    #allocation5 [shape = 's32[1]{0}', space=sflag, size = 0x4, scoped, tag = 'scoped memory for tpu_custom_call.1']
    #allocation6 [shape = 'u8[32768]{0}', space=vmem, size = 0x8000, scoped, tag = 'input window, operand 5, single buffered']
    #allocation7 [shape = 's32[1]{0}', space=sflag, size = 0x4, scoped, tag = 'scoped memory for tpu_custom_call.1']
    #allocation8 [shape = 'u8[512]{0}', space=vmem, size = 0x400, scoped, tag = 'output window, operand 0, single buffered']
    %15 = vsyncpa [#allocation4], 0
    %16 = vsyncpa [#allocation7], 0
    %17 = vsyncpa [#allocation5], 0
    // Predicated region
    $region2: #{tpu_custom_call.1} parent=1 // pred_check
      _
    $region3: #{tpu_custom_call.1} parent=1 // pred_check_branch
      %19 = sbr.rel (0) target = $region5
    $region4: #{tpu_custom_call.1} parent=1 // pred_region
      %s21 = ssub.s32 64, 64
      %22 = vsyncadd [#allocation4], %s21
      %s24 = sshll.u32 [#allocation3], 4
      %s25 = int_to_ptr.vmem [resolvable:$true] %s24
      %27 = dma.hbm_to_vmem [thread:$0]  %s0, 64, %s25, [#allocation4]
    $region5: #{tpu_custom_call.1} parent=1 // pred_fallthru
      _
    // Predicated region
    $region6: #{tpu_custom_call.1} parent=1 // pred_check
      _
    $region7: #{tpu_custom_call.1} parent=1 // pred_check_branch
      %29 = sbr.rel (0) target = $region9
    $region8: #{tpu_custom_call.1} parent=1 // pred_region
      _
    $region9: #{tpu_custom_call.1} parent=1 // pred_fallthru
      _
    // Predicated region
    $region10: #{tpu_custom_call.1} parent=1 // pred_check
      _
    $region11: #{tpu_custom_call.1} parent=1 // pred_check_branch
      %31 = sbr.rel (0) target = $region13
    $region12: #{tpu_custom_call.1} parent=1 // pred_region
      _
    $region13: #{tpu_custom_call.1} parent=1 // pred_fallthru
      _
    // Predicated region
    $region14: #{tpu_custom_call.1} parent=1 // pred_check
      _
    $region15: #{tpu_custom_call.1} parent=1 // pred_check_branch
      %33 = sbr.rel (0) target = $region17
    $region16: #{tpu_custom_call.1} parent=1 // pred_region
      _
    $region17: #{tpu_custom_call.1} parent=1 // pred_fallthru
      _
    // Predicated region
    $region18: #{tpu_custom_call.1} parent=1 // pred_check
      _
    $region19: #{tpu_custom_call.1} parent=1 // pred_check_branch
      %35 = sbr.rel (0) target = $region21
    $region20: #{tpu_custom_call.1} parent=1 // pred_region
      _
    $region21: #{tpu_custom_call.1} parent=1 // pred_fallthru
      _
    // Predicated region
    $region22: #{tpu_custom_call.1} parent=1 // pred_check
      _
    $region23: #{tpu_custom_call.1} parent=1 // pred_check_branch
      %37 = sbr.rel (0) target = $region25
    $region24: #{tpu_custom_call.1} parent=1 // pred_region
      %s39 = ssub.s32 1024, 1024
      %40 = vsyncadd [#allocation7], %s39
      %s41 = sshll.u32 [#allocation6], 4
      %s42 = int_to_ptr.vmem [resolvable:$true] %s41
      %47 = dma.hbm_to_vmem [thread:$0]  %s5, 1024, %s42, [#allocation7], 64, 64, 4
    $region25: #{tpu_custom_call.1} parent=1 // pred_fallthru
      _
    // Predicated region
    $region26: #{tpu_custom_call.1} parent=1 // pred_check
      _
    $region27: #{tpu_custom_call.1} parent=1 // pred_check_branch
      %49 = sbr.rel (0) target = $region29
    $region28: #{tpu_custom_call.1} parent=1 // pred_region
      _
    $region29: #{tpu_custom_call.1} parent=1 // pred_fallthru
      _
    // Predicated region
    $region30: #{tpu_custom_call.1} parent=1 // pred_check
      _
    $region31: #{tpu_custom_call.1} parent=1 // pred_check_branch
      %51 = sbr.rel (0) target = $region33
    $region32: #{tpu_custom_call.1} parent=1 // pred_region
      _
    $region33: #{tpu_custom_call.1} parent=1 // pred_fallthru
      _
    // Predicated region
    $region34: #{tpu_custom_call.1} parent=1 // pred_check
      _
    $region35: #{tpu_custom_call.1} parent=1 // pred_check_branch
      %53 = sbr.rel (0) target = $region37
    $region36: #{tpu_custom_call.1} parent=1 // pred_region
      _
    $region37: #{tpu_custom_call.1} parent=1 // pred_fallthru
      _
    // Predicated region
    $region38: #{tpu_custom_call.1} parent=1 // pred_check
      _
    $region39: #{tpu_custom_call.1} parent=1 // pred_check_branch
      %55 = sbr.rel (0) target = $region41
    $region40: #{tpu_custom_call.1} parent=1 // pred_region
      %56 = dma.done [#allocation4], 64
    $region41: #{tpu_custom_call.1} parent=1 // pred_fallthru
      _
    // Predicated region
    $region42: #{tpu_custom_call.1} parent=1 // pred_check
      _
    $region43: #{tpu_custom_call.1} parent=1 // pred_check_branch
      %58 = sbr.rel (0) target = $region45
    $region44: #{tpu_custom_call.1} parent=1 // pred_region
      %59 = dma.done [#allocation7], 1024
    $region45: #{tpu_custom_call.1} parent=1 // pred_fallthru
      _
    %v61 = vld [vmem:[#allocation3] sm:$0xf]
    %v62 = vld [vmem:[%s1] sm:$0xf]
    %v63 = vld [vmem:[%s4] sm:$0x1]
    %v64 = vld [vmem:[%s6] sm:$0x1]
    %v65 = vld [vmem:[%s7] sm:$0x1]
    %s66 = sld [smem:[#allocation2]]
    %v67 = vld [vmem:[%s2] sm:$0xf]
    %v68 = vld [vmem:[%s2 + $0x4] sm:$0x3]
    %v69 = vld [vmem:[%s3] sm:$0x3]
    %vm70 = vcmask 31744
    %v72 = vsel %vm70, %v62, 0
    %vm74 = vcmask 1041408
    %v76 = vsel %vm74, %v69, 0
    %78 = vmatprep.subr.bf16.mxu0 0
    %79 = vmatpush1.bf16.msra.mxu0 0
    %80 = vmatprep.subr.bf16.mxu0 0
    %81 = vmatpush1.bf16.msra.mxu0 0
    %82 = vmatprep.subr.bf16.mxu0 0
    %83 = vmatpush1.bf16.msra.mxu0 0
    %84 = vmatprep.subr.bf16.mxu0 0
    %85 = vmatpush1.bf16.msra.mxu0 0
    %86 = vmatprep.subr.bf16.mxu0 0
    %87 = vmatpush1.bf16.msra.mxu0 0
    %88 = vmatprep.subr.bf16.mxu0 0
    %89 = vmatpush1.bf16.msra.mxu0 0
    %90 = vmatprep.subr.bf16.mxu0 0
    %91 = vmatpush1.bf16.msra.mxu0 0
    %92 = vmatprep.subr.bf16.mxu0 0
    %93 = vmatpush1.bf16.msra.mxu0 %v76
    %94 = vmatprep.subr.bf16.mxu0 0
    %95 = vmatpush2.bf16.msra.mxu0 0
    %96 = vmatprep.subr.bf16.mxu0 0
    %97 = vmatpush2.bf16.msra.mxu0 0
    %98 = vmatprep.subr.bf16.mxu0 0
    %99 = vmatpush2.bf16.msra.mxu0 0
    %100 = vmatprep.subr.bf16.mxu0 0
    %101 = vmatpush2.bf16.msra.mxu0 0
    %102 = vmatprep.subr.bf16.mxu0 0
    %103 = vmatpush2.bf16.msra.mxu0 0
    %104 = vmatprep.subr.bf16.mxu0 0
    %105 = vmatpush2.bf16.msra.mxu0 0
    %106 = vmatprep.subr.bf16.mxu0 0
    %107 = vmatpush2.bf16.msra.mxu0 0
    %108 = vmatprep.subr.bf16.mxu0 0
    %109 = vmatpush2.bf16.msra.mxu0 0
    %110 = vmatprep.mubr.bf16.mxu0 0
    %111 = vmatmul.mubr.bf16.gmra.mxu0 %v72
    %v112 = vpop.f32.mrf.mxu0
    %v113 = vadd.f32 0.0, %v112
    %v114 = vpop.f32.mrf.mxu0
    %v115 = vpop.f32.mrf.mxu0
    %v116 = vpop.f32.mrf.mxu0
    %117 = vdwg.mxu0
    %v120 = vunpack.c.l.b16 %v67
    %v121 = vunpack.c.l.b16 %v68
    %v122 = vpack.c.b16 %v121, %v120
    %vm123 = vcmask 97280
    %v125 = vsel %vm123, %v61, 0
    %vm127 = vcmask 1045504
    %v129 = vsel %vm127, %v122, 0
    %131 = vmatprep.subr.bf16.mxu0 0
    %132 = vmatpush1.bf16.msra.mxu0 0
    %133 = vmatprep.subr.bf16.mxu0 0
    %134 = vmatpush1.bf16.msra.mxu0 0
    %135 = vmatprep.subr.bf16.mxu0 0
    %136 = vmatpush1.bf16.msra.mxu0 0
    %137 = vmatprep.subr.bf16.mxu0 0
    %138 = vmatpush1.bf16.msra.mxu0 0
    %139 = vmatprep.subr.bf16.mxu0 0
    %140 = vmatpush1.bf16.msra.mxu0 0
    %141 = vmatprep.subr.bf16.mxu0 0
    %142 = vmatpush1.bf16.msra.mxu0 0
    %143 = vmatprep.subr.bf16.mxu0 0
    %144 = vmatpush1.bf16.msra.mxu0 0
    %145 = vmatprep.subr.bf16.mxu0 0
    %146 = vmatpush1.bf16.msra.mxu0 %v129
    %147 = vmatprep.subr.bf16.mxu0 0
    %148 = vmatpush2.bf16.msra.mxu0 0
    %149 = vmatprep.subr.bf16.mxu0 0
    %150 = vmatpush2.bf16.msra.mxu0 0
    %151 = vmatprep.subr.bf16.mxu0 0
    %152 = vmatpush2.bf16.msra.mxu0 0
    %153 = vmatprep.subr.bf16.mxu0 0
    %154 = vmatpush2.bf16.msra.mxu0 0
    %155 = vmatprep.subr.bf16.mxu0 0
    %156 = vmatpush2.bf16.msra.mxu0 0
    %157 = vmatprep.subr.bf16.mxu0 0
    %158 = vmatpush2.bf16.msra.mxu0 0
    %159 = vmatprep.subr.bf16.mxu0 0
    %160 = vmatpush2.bf16.msra.mxu0 0
    %161 = vmatprep.subr.bf16.mxu0 0
    %162 = vmatpush2.bf16.msra.mxu0 0
    %163 = vmatprep.mubr.bf16.mxu0 0
    %164 = vmatmul.mubr.bf16.gmra.mxu0 %v125
    %v165 = vpop.f32.mrf.mxu0
    %v166 = vadd.f32 %v113, %v165
    %v167 = vpop.f32.mrf.mxu0
    %v168 = vpop.f32.mrf.mxu0
    %v169 = vpop.f32.mrf.mxu0
    %170 = vdwg.mxu0
    %v172 = vlaneseq
    %v173 = vshrl.u32 %v172, 7
    %v174 = vsub.s32 0, %v173
    %v175 = vrot.slane %v63, %v174
    %v177 = vadd.f32 %v166, %v175
    %v178 = vmax.f32 %v177, 0.0
    %v179 = vpack.c.bf16 %v178, %v178
    %v180 = vld [vmem:[#allocation6] sm:$0xf]
    %v181 = vld [vmem:[#allocation6 + $0x4] sm:$0xf]
    %v182 = vld [vmem:[#allocation6 + $0x8] sm:$0xf]
    %v183 = vld [vmem:[#allocation6 + $0xc] sm:$0xf]
    %v184 = vld [vmem:[#allocation6 + $0x10] sm:$0xf]
    %v185 = vld [vmem:[#allocation6 + $0x14] sm:$0xf]
    %v186 = vld [vmem:[#allocation6 + $0x18] sm:$0xf]
    %v187 = vld [vmem:[#allocation6 + $0x1c] sm:$0xf]
    %v188 = vld [vmem:[#allocation6 + $0x20] sm:$0xf]
    %v189 = vld [vmem:[#allocation6 + $0x24] sm:$0xf]
    %v190 = vld [vmem:[#allocation6 + $0x28] sm:$0xf]
    %v191 = vld [vmem:[#allocation6 + $0x2c] sm:$0xf]
    %v192 = vld [vmem:[#allocation6 + $0x30] sm:$0xf]
    %v193 = vld [vmem:[#allocation6 + $0x34] sm:$0xf]
    %v194 = vld [vmem:[#allocation6 + $0x38] sm:$0xf]
    %v195 = vld [vmem:[#allocation6 + $0x3c] sm:$0xf]
    %v197 = vlaneseq
    %v198 = vshrl.u32 %v197, 7
    %v199 = vsub.s32 0, %v198
    %v200 = vrot.slane %v64, %v199
    %v218 = vunpack.c.l.b16 %v180
    %v219 = vunpack.c.l.b16 %v181
    %v220 = vunpack.c.l.b16 %v182
    %v221 = vunpack.c.l.b16 %v183
    %v222 = vunpack.c.l.b16 %v184
    %v223 = vunpack.c.l.b16 %v185
    %v224 = vunpack.c.l.b16 %v186
    %v225 = vunpack.c.l.b16 %v187
    %v226 = vunpack.c.l.b16 %v188
    %v227 = vunpack.c.l.b16 %v189
    %v228 = vunpack.c.l.b16 %v190
    %v229 = vunpack.c.l.b16 %v191
    %v230 = vunpack.c.l.b16 %v192
    %v231 = vunpack.c.l.b16 %v193
    %v232 = vunpack.c.l.b16 %v194
    %v233 = vunpack.c.l.b16 %v195
    %v234 = vpack.c.b16 %v219, %v218
    %v235 = vpack.c.b16 %v221, %v220
    %v236 = vpack.c.b16 %v223, %v222
    %v237 = vpack.c.b16 %v225, %v224
    %v238 = vpack.c.b16 %v227, %v226
    %v239 = vpack.c.b16 %v229, %v228
    %v240 = vpack.c.b16 %v231, %v230
    %v241 = vpack.c.b16 %v233, %v232
    %250 = vmatprep.subr.bf16.mxu0 0
    %251 = vmatpush1.bf16.msra.mxu0 %v241
    %252 = vmatprep.subr.bf16.mxu0 0
    %253 = vmatpush1.bf16.msra.mxu0 %v240
    %254 = vmatprep.subr.bf16.mxu0 0
    %255 = vmatpush1.bf16.msra.mxu0 %v239
    %256 = vmatprep.subr.bf16.mxu0 0
    %257 = vmatpush1.bf16.msra.mxu0 %v238
    %258 = vmatprep.subr.bf16.mxu0 0
    %259 = vmatpush1.bf16.msra.mxu0 %v237
    %260 = vmatprep.subr.bf16.mxu0 0
    %261 = vmatpush1.bf16.msra.mxu0 %v236
    %262 = vmatprep.subr.bf16.mxu0 0
    %263 = vmatpush1.bf16.msra.mxu0 %v235
    %264 = vmatprep.subr.bf16.mxu0 0
    %265 = vmatpush1.bf16.msra.mxu0 %v234
    %266 = vmatprep.subr.bf16.mxu0 0
    %267 = vmatpush2.bf16.msra.mxu0 0
    %268 = vmatprep.subr.bf16.mxu0 0
    %269 = vmatpush2.bf16.msra.mxu0 0
    %270 = vmatprep.subr.bf16.mxu0 0
    %271 = vmatpush2.bf16.msra.mxu0 0
    %272 = vmatprep.subr.bf16.mxu0 0
    %273 = vmatpush2.bf16.msra.mxu0 0
    %274 = vmatprep.subr.bf16.mxu0 0
    %275 = vmatpush2.bf16.msra.mxu0 0
    %276 = vmatprep.subr.bf16.mxu0 0
    %277 = vmatpush2.bf16.msra.mxu0 0
    %278 = vmatprep.subr.bf16.mxu0 0
    %279 = vmatpush2.bf16.msra.mxu0 0
    %280 = vmatprep.subr.bf16.mxu0 0
    %281 = vmatpush2.bf16.msra.mxu0 0
    %282 = vmatprep.mubr.bf16.mxu0 0
    %283 = vmatmul.mubr.bf16.gmra.mxu0 %v179
    %v284 = vpop.f32.mrf.mxu0
    %v285 = vadd.f32 %v200, %v284
    %v286 = vpop.f32.mrf.mxu0
    %v287 = vpop.f32.mrf.mxu0
    %v288 = vpop.f32.mrf.mxu0
    %289 = vdwg.mxu0
    %v290 = vmax.f32 %v285, 0.0
    %v291 = vpack.c.bf16 %v290, %v290
    %v292 = vstv %s66
    %293 = vmatprep.subr.bf16.mxu0 0
    %294 = vmatpush1.bf16.xpose.msra.mxu0 0
    %295 = vmatprep.subr.bf16.mxu0 0
    %296 = vmatpush1.bf16.xpose.msra.mxu0 0
    %297 = vmatprep.subr.bf16.mxu0 0
    %298 = vmatpush1.bf16.xpose.msra.mxu0 0
    %299 = vmatprep.subr.bf16.mxu0 0
    %300 = vmatpush1.bf16.xpose.msra.mxu0 0
    %301 = vmatprep.subr.bf16.mxu0 0
    %302 = vmatpush1.bf16.xpose.msra.mxu0 0
    %303 = vmatprep.subr.bf16.mxu0 0
    %304 = vmatpush1.bf16.xpose.msra.mxu0 0
    %305 = vmatprep.subr.bf16.mxu0 0
    %306 = vmatpush1.bf16.xpose.msra.mxu0 0
    %307 = vmatprep.subr.bf16.mxu0 0
    %308 = vmatpush1.bf16.xpose.msra.mxu0 %v291
    %309 = vmatprep.subr.bf16.mxu0 0
    %310 = vmatpush2.bf16.xpose.msra.mxu0 0
    %311 = vmatprep.subr.bf16.mxu0 0
    %312 = vmatpush2.bf16.xpose.msra.mxu0 0
    %313 = vmatprep.subr.bf16.mxu0 0
    %314 = vmatpush2.bf16.xpose.msra.mxu0 0
    %315 = vmatprep.subr.bf16.mxu0 0
    %316 = vmatpush2.bf16.xpose.msra.mxu0 0
    %317 = vmatprep.subr.bf16.mxu0 0
    %318 = vmatpush2.bf16.xpose.msra.mxu0 0
    %319 = vmatprep.subr.bf16.mxu0 0
    %320 = vmatpush2.bf16.xpose.msra.mxu0 0
    %321 = vmatprep.subr.bf16.mxu0 0
    %322 = vmatpush2.bf16.xpose.msra.mxu0 0
    %323 = vmatprep.subr.bf16.mxu0 0
    %324 = vmatpush2.bf16.xpose.msra.mxu0 0
    %325 = vmatprep.mubr.bf16.mxu0 0
    %326 = vmatmul.mubr.bf16.gmra.mxu0 %v65
    %v327 = vpop.f32.mrf.mxu0
    %v328 = vadd.f32 %v292, %v327
    %v329 = vpop.f32.mrf.mxu0
    %v330 = vpop.f32.mrf.mxu0
    %v331 = vpop.f32.mrf.mxu0
    %332 = vdwg.mxu0
    %vm333 = vcmask 57344
    %334 = vst.msk [vmem:[#allocation8] sm:$0x1] %vm333, %v328
    // Predicated region
    $region46: #{tpu_custom_call.1} parent=1 // pred_check
      _
    $region47: #{tpu_custom_call.1} parent=1 // pred_check_branch
      %336 = sbr.rel (0) target = $region49
    $region48: #{tpu_custom_call.1} parent=1 // pred_region
      %s338 = ssub.s32 16, 16
      %339 = vsyncadd [#allocation5], %s338
      %s341 = sshll.u32 [#allocation8], 4
      %s342 = int_to_ptr.vmem [resolvable:$true] %s341
      %344 = dma.vmem_to_hbm [thread:$0]  %s342, 16, %s9, [#allocation5]
    $region49: #{tpu_custom_call.1} parent=1 // pred_fallthru
      _
    // Predicated region
    $region50: #{tpu_custom_call.1} parent=1 // pred_check
      _
    $region51: #{tpu_custom_call.1} parent=1 // pred_check_branch
      %346 = sbr.rel (0) target = $region53
    $region52: #{tpu_custom_call.1} parent=1 // pred_region
      %347 = dma.done [#allocation5], 16
    $region53: #{tpu_custom_call.1} parent=1 // pred_fallthru
      _
    %348 = vsyncpa [#allocation4], 1
    %349 = vsyncpa [#allocation7], 1
    %350 = vsyncpa [#allocation5], 1

</llo_original>
